<compile_context>
chip_gen: v5e
topology: v5e:2x2
jax: 0.10.0
libtpu: 0.0.40
codegen_flags: <defaults>
</compile_context>

<pallas_src>
import functools

import numpy as np
import jax
import jax.numpy as jnp
from jax.experimental import pallas as pl
from jax.experimental.pallas import tpu as pltpu

ARCSEC_TO_RAD = np.pi / (180.0 * 3600.0)

# Bound on the channel block: M = c_blk*npix saturates the MXU long before this, and it
# bounds the (static) relayout-loop unroll / generated code size.
_MAX_CHANNEL_BLOCK = 16


def _gridded_net_kernel(x_ref, lr_ref, li_ref, rr_ref, ri_ref, rs_ref,
                        vr_ref, vi_ref, xcol_s, zr_s, zi_s, *, c_blk, npix):
    # ---- BaseCube softplus + relayout to column-stacked Xcol (npix, c_blk*npix) ----
    # softplus is computed per channel inside the loop (EUP/VPU work interleaved with
    # the stores rather than a big serial prologue, and no block-wide f32 temp).
    for c in range(c_blk):
        x = x_ref[c]                                                    # (npix, npix) f32
        xsp = jnp.maximum(x, 0.0) + jnp.log(1.0 + jnp.exp(-jnp.abs(x)))
        xcol_s[:, pl.ds(c * npix, npix)] = xsp.astype(jnp.bfloat16)

    # ---- Left DFT(+conv) stage, channel-batched along N:  Zcol = L @ Xcol ----------
    xcol = xcol_s[...]
    zr = jnp.dot(lr_ref[...], xcol, preferred_element_type=jnp.float32)
    zi = jnp.dot(li_ref[...], xcol, preferred_element_type=jnp.float32)

    # Column-stacked -> row-stacked relayout of Z for the right stage (static slice
    # copies).  zs is NOT materialized; it is formed just before the third matmul.
    for c in range(c_blk):
        c0 = c * npix
        rows = pl.ds(c0, npix)
        zr_s[rows, :] = zr[:, c0:c0 + npix].astype(jnp.bfloat16)
        zi_s[rows, :] = zi[:, c0:c0 + npix].astype(jnp.bfloat16)

    # ---- Right DFT(+conv) stage, channel-batched along M, 3-multiply complex -------
    #   Y = Z @ R,  t1 = Zr@Rr, t2 = Zi@Ri, t3 = (Zr+Zi)@(Rr+Ri)
    #   Yr = t1 - t2,  Yi = t3 - t1 - t2
    zr_b = zr_s[...]
    zi_b = zi_s[...]
    t1 = jnp.dot(zr_b, rr_ref[...], preferred_element_type=jnp.float32)
    t2 = jnp.dot(zi_b, ri_ref[...], preferred_element_type=jnp.float32)
    vr_ref[...] = (t1 - t2).astype(vr_ref.dtype)
    s12 = t1 + t2                        # only s12 stays live while t3 is computed
    t3 = jnp.dot(zr_b + zi_b, rs_ref[...], preferred_element_type=jnp.float32)
    vi_ref[...] = (t3 - s12).astype(vi_ref.dtype)


def _tpu_generation_params():
    """(vmem_capacity_bytes, has_two_tensorcores) with conservative fallbacks."""
    kind = ""
    try:
        kind = jax.devices()[0].device_kind.lower()
    except Exception:
        pass
    single_core = any(t in kind for t in
                      ("v5 lite", "v5e", "v5lite", "v6 lite", "v6e", "trillium"))
    vmem_cap = None
    try:
        vmem_cap = int(pltpu.get_tpu_info().vmem_capacity_bytes)
    except Exception:
        vmem_cap = None
    if not vmem_cap or vmem_cap <= 0:
        # 128 MiB on the known single-core parts, conservative 64 MiB otherwise (v7x).
        vmem_cap = (128 if single_core else 64) * 1024 * 1024
    return vmem_cap, (not single_core)


def _pick_channel_block(nchan, npix, vmem_budget, two_tensorcores):
    """Largest channel block fitting the VMEM budget; on 2-TensorCore parts also leave
    >= 2 grid steps so both cores get independent work on the 'parallel' axis."""
    plane_f32 = npix * npix * 4
    const_bytes = 5 * npix * npix * 2 * 2      # 5 bf16 operator matrices, double-buffered
    # Per-channel-per-step VMEM in f32-plane equivalents:
    #   input block (2 bufs)               2      vr/vi f32 outputs (2 bufs each)   4
    #   xcol/zr/zi bf16 scratch            1.5    stage-1 f32 Z values              2
    #   (zr+zi) bf16 operand + t1/t2 live  2.5    spill / cast headroom             2
    per_chan = plane_f32 * 14
    cap = max(1, (vmem_budget - const_bytes) // per_chan)
    cap = int(min(cap, nchan, _MAX_CHANNEL_BLOCK))
    if two_tensorcores and nchan >= 2:
        cap = max(1, min(cap, nchan // 2))
    return max(d for d in range(1, cap + 1) if nchan % d == 0)


def gridded_net_forward(base_cube, cell_size):
    """base_cube: (nchan, npix, npix) float32.  Returns (nchan, npix, npix) complex64."""
    nchan, npix, _ = base_cube.shape

    # ---- host-side constant operators (built in float64, cast once to bf16) --------
    # 1-D Hann filter as a banded (npix, npix) matrix (zero-padding boundary).
    B = np.zeros((npix, npix), dtype=np.float64)
    for off, wt in zip((-1, 0, 1), (0.25, 0.5, 0.25)):
        B += np.diag(np.full(npix - abs(off), wt), k=off)
    # DFT matrix F[k, n] = exp(-2*pi*i*k*n / npix)   (symmetric).
    k = np.arange(npix)
    F = np.exp(-2j * np.pi * np.outer(k, k) / npix)
    # Fold conv + sqrt(pixel_area) into the DFT operators:
    #   area * F (B X B) F = (s*F@B) X (s*B@F) = L X R,   s = sqrt(area).
    s = cell_size * ARCSEC_TO_RAD
    L = s * (F @ B)
    R = s * (B @ F)            # = L^T; both kept so all MXU ops are plain matmuls

    to_bf16 = lambda a: jnp.asarray(a, dtype=jnp.bfloat16)
    Lr, Li = to_bf16(L.real), to_bf16(L.imag)
    Rr, Ri = to_bf16(R.real), to_bf16(R.imag)
    Rs = to_bf16(R.real + R.imag)          # for the 3-multiply complex product

    vmem_cap, two_cores = _tpu_generation_params()
    vmem_budget = int(vmem_cap * 0.60)     # per-step working-set budget
    vmem_limit = int(vmem_cap * 0.75)      # raised scoped-VMEM limit for the compiler

    c_blk = _pick_channel_block(nchan, npix, vmem_budget, two_cores)
    num_blocks = nchan // c_blk

    # TODO(synk): for npix >= ~1024 on v7x (64 MiB VMEM) add a second grid axis tiling
    #   the right-stage output columns (block the N dim of Rr/Ri/Rs and of vr/vi) so
    #   M = c_blk*npix stays large while the f32 output / t1-t3 footprint is bounded.
    # TODO(synk): single-buffer the five constant operators (pipeline_mode=
    #   pl.Buffered(1)), emit bf16 outputs, and evaluate int8 operators on v5e/v6e once
    #   the accuracy budget is re-validated at production npix.

    kernel = functools.partial(_gridded_net_kernel, c_blk=c_blk, npix=npix)

    const_spec = pl.BlockSpec((npix, npix), lambda b: (0, 0))
    out_spec = pl.BlockSpec((c_blk * npix, npix), lambda b: (b, 0))

    vr, vi = pl.pallas_call(
        kernel,
        out_shape=(
            jax.ShapeDtypeStruct((nchan * npix, npix), jnp.float32),
            jax.ShapeDtypeStruct((nchan * npix, npix), jnp.float32),
        ),
        grid_spec=pltpu.PrefetchScalarGridSpec(
            num_scalar_prefetch=0,
            grid=(num_blocks,),
            in_specs=[
                pl.BlockSpec((c_blk, npix, npix), lambda b: (b, 0, 0)),  # base-cube block
                const_spec, const_spec,                                  # Lr, Li
                const_spec, const_spec, const_spec,                      # Rr, Ri, Rs
            ],
            out_specs=[out_spec, out_spec],
            scratch_shapes=[
                pltpu.VMEM((npix, c_blk * npix), jnp.bfloat16),   # Xcol (column-stacked)
                pltpu.VMEM((c_blk * npix, npix), jnp.bfloat16),   # Zr   (row-stacked)
                pltpu.VMEM((c_blk * npix, npix), jnp.bfloat16),   # Zi   (row-stacked)
            ],
        ),
        compiler_params=pltpu.CompilerParams(
            dimension_semantics=("parallel",),
            vmem_limit_bytes=vmem_limit,
        ),
    )(base_cube, Lr, Li, Rr, Ri, Rs)

    # Single fused combine to complex64 (negligible vs. the MXU work at production
    # npix); the reshape is free.
    return jax.lax.complex(vr, vi).reshape(nchan, npix, npix)


def _reference_forward(base_cube, cell_size):
    """Pure-JAX reference matching the PyTorch GriddedNet.forward semantics."""
    nchan, npix, _ = base_cube.shape
    xsp = jax.nn.softplus(base_cube)
    w1 = jnp.array([0.25, 0.5, 0.25], dtype=jnp.float32)
    w2 = jnp.outer(w1, w1)
    pad = jnp.pad(xsp, ((0, 0), (1, 1), (1, 1)))
    conv = jnp.zeros_like(xsp)
    for di in range(3):
        for dj in range(3):
            conv = conv + w2[di, dj] * pad[:, di:di + npix, dj:dj + npix]
    scale = (cell_size * ARCSEC_TO_RAD) ** 2
    return scale * jnp.fft.fft2(conv)


if __name__ == "__main__":
    nchan, npix = 4, 16
    cell_size = 0.005  # arcsec, as in GridCoords

    # Deterministic "pre-packed base cube" parameter (BaseCube weights).
    key = jax.random.PRNGKey(0)
    base_cube = jax.random.normal(key, (nchan, npix, npix), dtype=jnp.float32)

    vis = gridded_net_forward(base_cube, cell_size)
    vis = jax.block_until_ready(vis)

    ref = _reference_forward(base_cube, cell_size)
    assert vis.shape == (nchan, npix, npix) and vis.dtype == jnp.complex64

    # bf16 MXU operands with f32 accumulation: validate with an error normalized to the
    # visibility magnitude (raw rtol/atol are meaningless at ~1e-13 absolute scale).
    # Expected error is ~1e-3..1e-2 of max|vis|; a broken kernel would be O(1).
    err = float(jnp.max(jnp.abs(vis - ref)) / jnp.max(jnp.abs(ref)))
    assert err < 3e-2, f"normalized max error too large: {err:.3e}"

    print("KERNEL_OK")
</pallas_src>

<mosaic_0001>
module attributes {stable_mosaic.version = 11 : i64} {
  func.func @_gridded_net_kernel(%arg0: i32, %arg1: memref<2x16x16xf32, #tpu.memory_space<vmem>>, %arg2: memref<16x16xbf16, #tpu.memory_space<vmem>>, %arg3: memref<16x16xbf16, #tpu.memory_space<vmem>>, %arg4: memref<16x16xbf16, #tpu.memory_space<vmem>>, %arg5: memref<16x16xbf16, #tpu.memory_space<vmem>>, %arg6: memref<16x16xbf16, #tpu.memory_space<vmem>>, %arg7: memref<32x16xf32, #tpu.memory_space<vmem>>, %arg8: memref<32x16xf32, #tpu.memory_space<vmem>>, %arg9: memref<16x32xbf16, #tpu.memory_space<vmem>>, %arg10: memref<32x16xbf16, #tpu.memory_space<vmem>>, %arg11: memref<32x16xbf16, #tpu.memory_space<vmem>>) attributes {dimension_semantics = [#tpu.dimension_semantics<parallel>], iteration_bounds = array<i64: 2>, scalar_prefetch = 0 : i64, scratch_operands = 3 : i64, tpu.core_type = #tpu.core_type<tc>, window_params = [{transform_indices = @transform_0, window_bounds = array<i64: 2, 16, 16>}, {pipeline_mode = #tpu.pipeline_mode<synchronous>, transform_indices = @transform_1, window_bounds = array<i64: 16, 16>}, {pipeline_mode = #tpu.pipeline_mode<synchronous>, transform_indices = @transform_2, window_bounds = array<i64: 16, 16>}, {pipeline_mode = #tpu.pipeline_mode<synchronous>, transform_indices = @transform_3, window_bounds = array<i64: 16, 16>}, {pipeline_mode = #tpu.pipeline_mode<synchronous>, transform_indices = @transform_4, window_bounds = array<i64: 16, 16>}, {pipeline_mode = #tpu.pipeline_mode<synchronous>, transform_indices = @transform_5, window_bounds = array<i64: 16, 16>}, {transform_indices = @transform_6, window_bounds = array<i64: 32, 16>}, {transform_indices = @transform_7, window_bounds = array<i64: 32, 16>}]} {
    %c0 = arith.constant 0 : index
    %c0_0 = arith.constant 0 : index
    %c0_1 = arith.constant 0 : index
    %0 = vector.load %arg1[%c0, %c0_0, %c0_1] : memref<2x16x16xf32, #tpu.memory_space<vmem>>, vector<1x16x16xf32>
    %1 = vector.shape_cast %0 : vector<1x16x16xf32> to vector<16x16xf32>
    %cst = arith.constant 0.000000e+00 : f32
    %2 = vector.broadcast %cst : f32 to vector<16x16xf32>
    %3 = arith.maximumf %1, %2 : vector<16x16xf32>
    %4 = math.absf %1 : vector<16x16xf32>
    %cst_2 = arith.constant 0.000000e+00 : f32
    %5 = vector.broadcast %cst_2 : f32 to vector<16x16xf32>
    %6 = arith.subf %5, %4 : vector<16x16xf32>
    %7 = math.exp %6 : vector<16x16xf32>
    %cst_3 = arith.constant 1.000000e+00 : f32
    %8 = vector.broadcast %cst_3 : f32 to vector<16x16xf32>
    %9 = arith.addf %8, %7 : vector<16x16xf32>
    %10 = math.log %9 : vector<16x16xf32>
    %11 = arith.addf %3, %10 : vector<16x16xf32>
    %12 = arith.truncf %11 : vector<16x16xf32> to vector<16x16xbf16>
    %c0_4 = arith.constant 0 : index
    %c0_5 = arith.constant 0 : index
    %13 = vector.load %arg9[%c0_4, %c0_5] : memref<16x32xbf16, #tpu.memory_space<vmem>>, vector<16x16xbf16>
    tpu.vector_store %arg9[%c0_4, %c0_5], %12 {strides = array<i32>} : memref<16x32xbf16, #tpu.memory_space<vmem>>, vector<16x16xbf16>,
    %c1 = arith.constant 1 : index
    %c0_6 = arith.constant 0 : index
    %c0_7 = arith.constant 0 : index
    %14 = vector.load %arg1[%c1, %c0_6, %c0_7] : memref<2x16x16xf32, #tpu.memory_space<vmem>>, vector<1x16x16xf32>
    %15 = vector.shape_cast %14 : vector<1x16x16xf32> to vector<16x16xf32>
    %cst_8 = arith.constant 0.000000e+00 : f32
    %16 = vector.broadcast %cst_8 : f32 to vector<16x16xf32>
    %17 = arith.maximumf %15, %16 : vector<16x16xf32>
    %18 = math.absf %15 : vector<16x16xf32>
    %cst_9 = arith.constant 0.000000e+00 : f32
    %19 = vector.broadcast %cst_9 : f32 to vector<16x16xf32>
    %20 = arith.subf %19, %18 : vector<16x16xf32>
    %21 = math.exp %20 : vector<16x16xf32>
    %cst_10 = arith.constant 1.000000e+00 : f32
    %22 = vector.broadcast %cst_10 : f32 to vector<16x16xf32>
    %23 = arith.addf %22, %21 : vector<16x16xf32>
    %24 = math.log %23 : vector<16x16xf32>
    %25 = arith.addf %17, %24 : vector<16x16xf32>
    %26 = arith.truncf %25 : vector<16x16xf32> to vector<16x16xbf16>
    %c0_11 = arith.constant 0 : index
    %c16 = arith.constant 16 : index
    %27 = vector.load %arg9[%c0_11, %c16] : memref<16x32xbf16, #tpu.memory_space<vmem>>, vector<16x16xbf16>
    tpu.vector_store %arg9[%c0_11, %c16], %26 {strides = array<i32>} : memref<16x32xbf16, #tpu.memory_space<vmem>>, vector<16x16xbf16>,
    %c0_12 = arith.constant 0 : index
    %c0_13 = arith.constant 0 : index
    %28 = vector.load %arg9[%c0_12, %c0_13] : memref<16x32xbf16, #tpu.memory_space<vmem>>, vector<16x32xbf16>
    %c0_14 = arith.constant 0 : index
    %c0_15 = arith.constant 0 : index
    %29 = vector.load %arg2[%c0_14, %c0_15] : memref<16x16xbf16, #tpu.memory_space<vmem>>, vector<16x16xbf16>
    %cst_16 = arith.constant dense<0.000000e+00> : vector<16x32xf32>
    %30 = tpu.matmul %29, %28, %cst_16 {dimension_numbers = #tpu.dot_dimension_numbers<[1], [0], [0], [1], [0, 0, 1, 1], [], []>} : vector<16x16xbf16>, vector<16x32xbf16>, vector<16x32xf32> -> vector<16x32xf32>
    %c0_17 = arith.constant 0 : index
    %c0_18 = arith.constant 0 : index
    %31 = vector.load %arg3[%c0_17, %c0_18] : memref<16x16xbf16, #tpu.memory_space<vmem>>, vector<16x16xbf16>
    %cst_19 = arith.constant dense<0.000000e+00> : vector<16x32xf32>
    %32 = tpu.matmul %31, %28, %cst_19 {dimension_numbers = #tpu.dot_dimension_numbers<[1], [0], [0], [1], [0, 0, 1, 1], [], []>} : vector<16x16xbf16>, vector<16x32xbf16>, vector<16x32xf32> -> vector<16x32xf32>
    %33 = vector.extract_strided_slice %30 {offsets = [0, 0], sizes = [16, 16], strides = [1, 1]} : vector<16x32xf32> to vector<16x16xf32>
    %34 = arith.truncf %33 : vector<16x16xf32> to vector<16x16xbf16>
    %c0_20 = arith.constant 0 : index
    %c0_21 = arith.constant 0 : index
    %35 = vector.load %arg10[%c0_20, %c0_21] : memref<32x16xbf16, #tpu.memory_space<vmem>>, vector<16x16xbf16>
    tpu.vector_store %arg10[%c0_20, %c0_21], %34 {strides = array<i32>} : memref<32x16xbf16, #tpu.memory_space<vmem>>, vector<16x16xbf16>,
    %36 = vector.extract_strided_slice %32 {offsets = [0, 0], sizes = [16, 16], strides = [1, 1]} : vector<16x32xf32> to vector<16x16xf32>
    %37 = arith.truncf %36 : vector<16x16xf32> to vector<16x16xbf16>
    %c0_22 = arith.constant 0 : index
    %c0_23 = arith.constant 0 : index
    %38 = vector.load %arg11[%c0_22, %c0_23] : memref<32x16xbf16, #tpu.memory_space<vmem>>, vector<16x16xbf16>
    tpu.vector_store %arg11[%c0_22, %c0_23], %37 {strides = array<i32>} : memref<32x16xbf16, #tpu.memory_space<vmem>>, vector<16x16xbf16>,
    %39 = vector.extract_strided_slice %30 {offsets = [0, 16], sizes = [16, 16], strides = [1, 1]} : vector<16x32xf32> to vector<16x16xf32>
    %40 = arith.truncf %39 : vector<16x16xf32> to vector<16x16xbf16>
    %c16_24 = arith.constant 16 : index
    %c0_25 = arith.constant 0 : index
    %41 = vector.load %arg10[%c16_24, %c0_25] : memref<32x16xbf16, #tpu.memory_space<vmem>>, vector<16x16xbf16>
    tpu.vector_store %arg10[%c16_24, %c0_25], %40 {strides = array<i32>} : memref<32x16xbf16, #tpu.memory_space<vmem>>, vector<16x16xbf16>,
    %42 = vector.extract_strided_slice %32 {offsets = [0, 16], sizes = [16, 16], strides = [1, 1]} : vector<16x32xf32> to vector<16x16xf32>
    %43 = arith.truncf %42 : vector<16x16xf32> to vector<16x16xbf16>
    %c16_26 = arith.constant 16 : index
    %c0_27 = arith.constant 0 : index
    %44 = vector.load %arg11[%c16_26, %c0_27] : memref<32x16xbf16, #tpu.memory_space<vmem>>, vector<16x16xbf16>
    tpu.vector_store %arg11[%c16_26, %c0_27], %43 {strides = array<i32>} : memref<32x16xbf16, #tpu.memory_space<vmem>>, vector<16x16xbf16>,
    %c0_28 = arith.constant 0 : index
    %c0_29 = arith.constant 0 : index
    %45 = vector.load %arg10[%c0_28, %c0_29] : memref<32x16xbf16, #tpu.memory_space<vmem>>, vector<32x16xbf16>
    %c0_30 = arith.constant 0 : index
    %c0_31 = arith.constant 0 : index
    %46 = vector.load %arg11[%c0_30, %c0_31] : memref<32x16xbf16, #tpu.memory_space<vmem>>, vector<32x16xbf16>
    %c0_32 = arith.constant 0 : index
    %c0_33 = arith.constant 0 : index
    %47 = vector.load %arg4[%c0_32, %c0_33] : memref<16x16xbf16, #tpu.memory_space<vmem>>, vector<16x16xbf16>
    %cst_34 = arith.constant dense<0.000000e+00> : vector<32x16xf32>
    %48 = tpu.matmul %45, %47, %cst_34 {dimension_numbers = #tpu.dot_dimension_numbers<[1], [0], [0], [1], [0, 0, 1, 1], [], []>} : vector<32x16xbf16>, vector<16x16xbf16>, vector<32x16xf32> -> vector<32x16xf32>
    %c0_35 = arith.constant 0 : index
    %c0_36 = arith.constant 0 : index
    %49 = vector.load %arg5[%c0_35, %c0_36] : memref<16x16xbf16, #tpu.memory_space<vmem>>, vector<16x16xbf16>
    %cst_37 = arith.constant dense<0.000000e+00> : vector<32x16xf32>
    %50 = tpu.matmul %46, %49, %cst_37 {dimension_numbers = #tpu.dot_dimension_numbers<[1], [0], [0], [1], [0, 0, 1, 1], [], []>} : vector<32x16xbf16>, vector<16x16xbf16>, vector<32x16xf32> -> vector<32x16xf32>
    %51 = arith.subf %48, %50 : vector<32x16xf32>
    %c0_38 = arith.constant 0 : index
    %c0_39 = arith.constant 0 : index
    %52 = vector.load %arg7[%c0_38, %c0_39] : memref<32x16xf32, #tpu.memory_space<vmem>>, vector<32x16xf32>
    tpu.vector_store %arg7[%c0_38, %c0_39], %51 {strides = array<i32>} : memref<32x16xf32, #tpu.memory_space<vmem>>, vector<32x16xf32>,
    %53 = arith.addf %48, %50 : vector<32x16xf32>
    %54 = arith.addf %45, %46 : vector<32x16xbf16>
    %c0_40 = arith.constant 0 : index
    %c0_41 = arith.constant 0 : index
    %55 = vector.load %arg6[%c0_40, %c0_41] : memref<16x16xbf16, #tpu.memory_space<vmem>>, vector<16x16xbf16>
    %cst_42 = arith.constant dense<0.000000e+00> : vector<32x16xf32>
    %56 = tpu.matmul %54, %55, %cst_42 {dimension_numbers = #tpu.dot_dimension_numbers<[1], [0], [0], [1], [0, 0, 1, 1], [], []>} : vector<32x16xbf16>, vector<16x16xbf16>, vector<32x16xf32> -> vector<32x16xf32>
    %57 = arith.subf %56, %53 : vector<32x16xf32>
    %c0_43 = arith.constant 0 : index
    %c0_44 = arith.constant 0 : index
    %58 = vector.load %arg8[%c0_43, %c0_44] : memref<32x16xf32, #tpu.memory_space<vmem>>, vector<32x16xf32>
    tpu.vector_store %arg8[%c0_43, %c0_44], %57 {strides = array<i32>} : memref<32x16xf32, #tpu.memory_space<vmem>>, vector<32x16xf32>,
    return
  }
  func.func @transform_0(%arg0: i32) -> (i32, i32, i32) {
    %c0_i32 = arith.constant 0 : i32
    %c0_i32_0 = arith.constant 0 : i32
    %c0_i32_1 = arith.constant 0 : i32
    return %arg0, %c0_i32, %c0_i32_0 : i32, i32, i32
  }
  func.func @transform_1(%arg0: i32) -> (i32, i32) {
    %c0_i32 = arith.constant 0 : i32
    %c0_i32_0 = arith.constant 0 : i32
    %c0_i32_1 = arith.constant 0 : i32
    return %c0_i32, %c0_i32_0 : i32, i32
  }
  func.func @transform_2(%arg0: i32) -> (i32, i32) {
    %c0_i32 = arith.constant 0 : i32
    %c0_i32_0 = arith.constant 0 : i32
    %c0_i32_1 = arith.constant 0 : i32
    return %c0_i32, %c0_i32_0 : i32, i32
  }
  func.func @transform_3(%arg0: i32) -> (i32, i32) {
    %c0_i32 = arith.constant 0 : i32
    %c0_i32_0 = arith.constant 0 : i32
    %c0_i32_1 = arith.constant 0 : i32
    return %c0_i32, %c0_i32_0 : i32, i32
  }
  func.func @transform_4(%arg0: i32) -> (i32, i32) {
    %c0_i32 = arith.constant 0 : i32
    %c0_i32_0 = arith.constant 0 : i32
    %c0_i32_1 = arith.constant 0 : i32
    return %c0_i32, %c0_i32_0 : i32, i32
  }
  func.func @transform_5(%arg0: i32) -> (i32, i32) {
    %c0_i32 = arith.constant 0 : i32
    %c0_i32_0 = arith.constant 0 : i32
    %c0_i32_1 = arith.constant 0 : i32
    return %c0_i32, %c0_i32_0 : i32, i32
  }
  func.func @transform_6(%arg0: i32) -> (i32, i32) {
    %c0_i32 = arith.constant 0 : i32
    %c0_i32_0 = arith.constant 0 : i32
    return %arg0, %c0_i32 : i32, i32
  }
  func.func @transform_7(%arg0: i32) -> (i32, i32) {
    %c0_i32 = arith.constant 0 : i32
    %c0_i32_0 = arith.constant 0 : i32
    return %arg0, %c0_i32 : i32, i32
  }
}

</mosaic_0001>

<llo_original>
// kernel: tpu_custom_call.1
$region0: #{tpu_custom_call.1}
  #allocation0 [shape = 'u32[]', space=smem, size = 0x4, offset = 0x4, fixed_abs, tag = 'smem constant byte address 0x4 - core index']
  #allocation1 [shape = 'u32[72,128]{1,0:T(1,128)}', space=vmem, size = 0x9000, scoped, tag = 'internal scratch']
  #allocation2 [shape = 'bf16[16,32]{1,0:T(8,128)(2,1)}', space=vmem, size = 0x1000, scoped, tag = 'scratch operand']
  #allocation3 [shape = 'bf16[32,16]{1,0:T(8,128)(2,1)}', space=vmem, size = 0x2000, scoped, tag = 'scratch operand']
  #allocation4 [shape = 'bf16[32,16]{1,0:T(8,128)(2,1)}', space=vmem, size = 0x2000, scoped, tag = 'scratch operand']
  %s0 = inlined_call_operand.hbm [shape: f32[4,16,16], index: 0, kind: input, shape index: {}]
  %s1 = inlined_call_operand.hbm [shape: bf16[16,16], index: 1, kind: input, shape index: {}]
  %s2 = inlined_call_operand.hbm [shape: bf16[16,16], index: 2, kind: input, shape index: {}]
  %s3 = inlined_call_operand.hbm [shape: bf16[16,16], index: 3, kind: input, shape index: {}]
  %s4 = inlined_call_operand.hbm [shape: bf16[16,16], index: 4, kind: input, shape index: {}]
  %s5 = inlined_call_operand.hbm [shape: bf16[16,16], index: 5, kind: input, shape index: {}]
  %s6 = inlined_call_operand.vmem [shape: f32[64,16], index: 6, kind: output, shape index: {0}]
  %s7 = inlined_call_operand.vmem [shape: f32[64,16], index: 7, kind: output, shape index: {1}]
  %8 = xla_tuple %s6, %s7
  %s9 = sld [smem:[#allocation0]]
  $region89: #{tpu_custom_call.1} parent=0
    _
  %s11 = ssub.s32 1, %s9
  %s12 = scalar_select 0, %s11, %s9
  $region1: #{tpu_custom_call.1} parent=0
    #allocation5 [shape = 'u8[32768]{0}', space=vmem, size = 0x8000, scoped, tag = 'input window, operand 0']
    #allocation6 [shape = 's32[2]{0}', space=sflag, size = 0x8, scoped, tag = 'scoped memory for tpu_custom_call.1']
    #allocation7 [shape = 'u8[4096]{0}', space=vmem, size = 0x1000, scoped, tag = 'input window, operand 1, single buffered']
    #allocation8 [shape = 's32[1]{0}', space=sflag, size = 0x4, scoped, tag = 'scoped memory for tpu_custom_call.1']
    #allocation9 [shape = 'u8[4096]{0}', space=vmem, size = 0x1000, scoped, tag = 'input window, operand 2, single buffered']
    #allocation10 [shape = 'u8[4096]{0}', space=vmem, size = 0x1000, scoped, tag = 'input window, operand 3, single buffered']
    #allocation11 [shape = 's32[1]{0}', space=sflag, size = 0x4, scoped, tag = 'scoped memory for tpu_custom_call.1']
    #allocation12 [shape = 'u8[4096]{0}', space=vmem, size = 0x1000, scoped, tag = 'input window, operand 4, single buffered']
    #allocation13 [shape = 'u8[4096]{0}', space=vmem, size = 0x1000, scoped, tag = 'input window, operand 5, single buffered']
    #allocation14 [shape = 's32[1]{0}', space=sflag, size = 0x4, scoped, tag = 'scoped memory for tpu_custom_call.1']
    %13 = vsyncpa [#allocation6], 0
    %s14 = scalar_lea.sflag [#allocation6], 1
    %15 = vsyncpa %s14, 0
    %16 = vsyncpa [#allocation8], 0
    %17 = vsyncpa [#allocation11], 0
    %18 = vsyncpa [#allocation14], 0
    loop: start=0, step=1, limit=4
    $region2: #{tpu_custom_call.1} parent=1 // loop_pre_header
      _
    $region3: #{tpu_custom_call.1} parent=1 // loop_header
      %s20 = sphi 0, %s24
      %p21 = scmp.ge.s32.totalorder %s20, 4
      %s30 = sphi 0, %s32
      %s33 = sphi 0, %s30
      %s34 = sphi 0, %s33
      %s50 = sphi 0, %s34
      %s54 = sphi 0, %s54
      %s56 = sphi 0, %s54
      %s57 = sphi 0, %s56
      %s71 = sphi 0, %s57
      %s75 = sphi 0, %s75
      %s77 = sphi 0, %s75
      %s78 = sphi 0, %s77
      %s92 = sphi 0, %s78
      %s96 = sphi 0, %s96
      %s98 = sphi 0, %s96
      %s99 = sphi 0, %s98
      %s113 = sphi 0, %s99
      %s117 = sphi 0, %s117
      %s119 = sphi 0, %s117
      %s120 = sphi 0, %s119
      %s134 = sphi 0, %s120
      %s138 = sphi 0, %s138
      %s140 = sphi 0, %s138
      %s141 = sphi 0, %s140
      %s155 = sphi 0, %s141
      %s161 = sphi 0, %s163
      %s164 = sphi 0, %s161
      %s165 = sphi 0, %s164
      %s181 = sphi 0, %s165
      %s187 = sphi 0, %s189
      %s190 = sphi 0, %s187
      %s191 = sphi 0, %s190
      %s207 = sphi 0, %s191
    $region4: #{tpu_custom_call.1} parent=1 // loop_header_branch
      %23 = sbr.rel (%p21) target = $region8
    $region5: #{tpu_custom_call.1} parent=1 // loop_body
      %s25 = ssub.s32 %s20, 1
      %s26 = ssub.s32 %s20, 2
      %s27 = sadd.s32 %s20, 1
      %s28 = ssub.s32 %s20, %s27
      %p29 = scmp.eq.s32.totalorder %s28, 0
      %s31 = sadd.s32 %s30, 1
      %s32 = scalar_select %p29, %s30, %s31
      %p35 = pneg %p29
      %p36 = scmp.eq.s32.totalorder %s20, 1
      %p37 = por %p35, %p36
      %p38 = scmp.ne.s32.totalorder %s30, %s33
      %p39 = scmp.eq.s32.totalorder %s20, 0
      %p40 = por %p38, %p39
      %p41 = scmp.ne.s32.totalorder %s30, %s33
      %p42 = scmp.eq.s32.totalorder %s25, 1
      %p43 = por %p41, %p42
      %p44 = scmp.ne.s32.totalorder %s33, %s34
      %p45 = scmp.eq.s32.totalorder %s25, 0
      %p46 = por %p44, %p45
      %p47 = scmp.ne.s32.totalorder %s33, %s34
      %p48 = scmp.eq.s32.totalorder %s26, 1
      %p49 = por %p47, %p48
      %p51 = scmp.ne.s32.totalorder %s34, %s50
      %p52 = scmp.eq.s32.totalorder %s26, 0
      %p53 = por %p51, %p52
      %s55 = sadd.s32 %s54, 1
      %p58 = scmp.eq.s32.totalorder %s20, 1
      %p59 = scmp.ne.s32.totalorder %s54, %s56
      %p60 = scmp.eq.s32.totalorder %s20, 0
      %p61 = por %p59, %p60
      %p62 = scmp.ne.s32.totalorder %s54, %s56
      %p63 = scmp.eq.s32.totalorder %s25, 1
      %p64 = por %p62, %p63
      %p65 = scmp.ne.s32.totalorder %s56, %s57
      %p66 = scmp.eq.s32.totalorder %s25, 0
      %p67 = por %p65, %p66
      %p68 = scmp.ne.s32.totalorder %s56, %s57
      %p69 = scmp.eq.s32.totalorder %s26, 1
      %p70 = por %p68, %p69
      %p72 = scmp.ne.s32.totalorder %s57, %s71
      %p73 = scmp.eq.s32.totalorder %s26, 0
      %p74 = por %p72, %p73
      %s76 = sadd.s32 %s75, 1
      %p79 = scmp.eq.s32.totalorder %s20, 1
      %p80 = scmp.ne.s32.totalorder %s75, %s77
      %p81 = scmp.eq.s32.totalorder %s20, 0
      %p82 = por %p80, %p81
      %p83 = scmp.ne.s32.totalorder %s75, %s77
      %p84 = scmp.eq.s32.totalorder %s25, 1
      %p85 = por %p83, %p84
      %p86 = scmp.ne.s32.totalorder %s77, %s78
      %p87 = scmp.eq.s32.totalorder %s25, 0
      %p88 = por %p86, %p87
      %p89 = scmp.ne.s32.totalorder %s77, %s78
      %p90 = scmp.eq.s32.totalorder %s26, 1
      %p91 = por %p89, %p90
      %p93 = scmp.ne.s32.totalorder %s78, %s92
      %p94 = scmp.eq.s32.totalorder %s26, 0
      %p95 = por %p93, %p94
      %s97 = sadd.s32 %s96, 1
      %p100 = scmp.eq.s32.totalorder %s20, 1
      %p101 = scmp.ne.s32.totalorder %s96, %s98
      %p102 = scmp.eq.s32.totalorder %s20, 0
      %p103 = por %p101, %p102
      %p104 = scmp.ne.s32.totalorder %s96, %s98
      %p105 = scmp.eq.s32.totalorder %s25, 1
      %p106 = por %p104, %p105
      %p107 = scmp.ne.s32.totalorder %s98, %s99
      %p108 = scmp.eq.s32.totalorder %s25, 0
      %p109 = por %p107, %p108
      %p110 = scmp.ne.s32.totalorder %s98, %s99
      %p111 = scmp.eq.s32.totalorder %s26, 1
      %p112 = por %p110, %p111
      %p114 = scmp.ne.s32.totalorder %s99, %s113
      %p115 = scmp.eq.s32.totalorder %s26, 0
      %p116 = por %p114, %p115
      %s118 = sadd.s32 %s117, 1
      %p121 = scmp.eq.s32.totalorder %s20, 1
      %p122 = scmp.ne.s32.totalorder %s117, %s119
      %p123 = scmp.eq.s32.totalorder %s20, 0
      %p124 = por %p122, %p123
      %p125 = scmp.ne.s32.totalorder %s117, %s119
      %p126 = scmp.eq.s32.totalorder %s25, 1
      %p127 = por %p125, %p126
      %p128 = scmp.ne.s32.totalorder %s119, %s120
      %p129 = scmp.eq.s32.totalorder %s25, 0
      %p130 = por %p128, %p129
      %p131 = scmp.ne.s32.totalorder %s119, %s120
      %p132 = scmp.eq.s32.totalorder %s26, 1
      %p133 = por %p131, %p132
      %p135 = scmp.ne.s32.totalorder %s120, %s134
      %p136 = scmp.eq.s32.totalorder %s26, 0
      %p137 = por %p135, %p136
      %s139 = sadd.s32 %s138, 1
      %p142 = scmp.eq.s32.totalorder %s20, 1
      %p143 = scmp.ne.s32.totalorder %s138, %s140
      %p144 = scmp.eq.s32.totalorder %s20, 0
      %p145 = por %p143, %p144
      %p146 = scmp.ne.s32.totalorder %s138, %s140
      %p147 = scmp.eq.s32.totalorder %s25, 1
      %p148 = por %p146, %p147
      %p149 = scmp.ne.s32.totalorder %s140, %s141
      %p150 = scmp.eq.s32.totalorder %s25, 0
      %p151 = por %p149, %p150
      %p152 = scmp.ne.s32.totalorder %s140, %s141
      %p153 = scmp.eq.s32.totalorder %s26, 1
      %p154 = por %p152, %p153
      %p156 = scmp.ne.s32.totalorder %s141, %s155
      %p157 = scmp.eq.s32.totalorder %s26, 0
      %p158 = por %p156, %p157
      %s159 = ssub.s32 %s20, %s27
      %p160 = scmp.eq.s32.totalorder %s159, 0
      %s162 = sadd.s32 %s161, 1
      %s163 = scalar_select %p160, %s161, %s162
      %p166 = pneg %p160
      %p167 = scmp.eq.s32.totalorder %s20, 1
      %p168 = por %p166, %p167
      %p169 = scmp.ne.s32.totalorder %s161, %s164
      %p170 = scmp.eq.s32.totalorder %s20, 0
      %p171 = por %p169, %p170
      %p172 = scmp.ne.s32.totalorder %s161, %s164
      %p173 = scmp.eq.s32.totalorder %s25, 1
      %p174 = por %p172, %p173
      %p175 = scmp.ne.s32.totalorder %s164, %s165
      %p176 = scmp.eq.s32.totalorder %s25, 0
      %p177 = por %p175, %p176
      %p178 = scmp.ne.s32.totalorder %s164, %s165
      %p179 = scmp.eq.s32.totalorder %s26, 1
      %p180 = por %p178, %p179
      %p182 = scmp.ne.s32.totalorder %s165, %s181
      %p183 = scmp.eq.s32.totalorder %s26, 0
      %p184 = por %p182, %p183
      %s185 = ssub.s32 %s20, %s27
      %p186 = scmp.eq.s32.totalorder %s185, 0
      %s188 = sadd.s32 %s187, 1
      %s189 = scalar_select %p186, %s187, %s188
      %p192 = pneg %p186
      %p193 = scmp.eq.s32.totalorder %s20, 1
      %p194 = por %p192, %p193
      %p195 = scmp.ne.s32.totalorder %s187, %s190
      %p196 = scmp.eq.s32.totalorder %s20, 0
      %p197 = por %p195, %p196
      %p198 = scmp.ne.s32.totalorder %s187, %s190
      %p199 = scmp.eq.s32.totalorder %s25, 1
      %p200 = por %p198, %p199
      %p201 = scmp.ne.s32.totalorder %s190, %s191
      %p202 = scmp.eq.s32.totalorder %s25, 0
      %p203 = por %p201, %p202
      %p204 = scmp.ne.s32.totalorder %s190, %s191
      %p205 = scmp.eq.s32.totalorder %s26, 1
      %p206 = por %p204, %p205
      %p208 = scmp.ne.s32.totalorder %s191, %s207
      %p209 = scmp.eq.s32.totalorder %s26, 0
      %p210 = por %p208, %p209
      %p211 = scmp.le.s32.totalorder 1, %s20
      %p212 = scmp.lt.s32.totalorder %s20, 3
      %p213 = pnand %p211, %p212
      %p214 = pneg %p213
      // Predicated region
      $region9: #{tpu_custom_call.1} parent=5 // pred_check
        _
      $region10: #{tpu_custom_call.1} parent=5 // pred_check_branch
        %216 = sbr.rel (%p213) target = $region12
      $region11: #{tpu_custom_call.1} parent=5 // pred_region
        %s217 = ssub.s32 %s20, 1
        // Predicated region
        $region13: #{tpu_custom_call.1} parent=11 // pred_check
          %p218 = pneg %p67
        $region14: #{tpu_custom_call.1} parent=11 // pred_check_branch
          %220 = sbr.rel (%p218) target = $region16
        $region15: #{tpu_custom_call.1} parent=11 // pred_region
          %222 = vsyncadd [#allocation8], 0
          %s223 = sshll.u32 %s1, 4
          %s224 = int_to_ptr.hbm [resolvable:$true] %s223
          %s225 = sshll.u32 [#allocation7], 4
          %s226 = int_to_ptr.vmem [resolvable:$true] %s225
          %231 = dma.hbm_to_vmem [thread:$0]  %s224, 128, %s226, [#allocation8], 64, 64, 4
        $region16: #{tpu_custom_call.1} parent=11 // pred_fallthru
          _
        // Predicated region
        $region17: #{tpu_custom_call.1} parent=11 // pred_check
          %p232 = pneg %p88
        $region18: #{tpu_custom_call.1} parent=11 // pred_check_branch
          %234 = sbr.rel (%p232) target = $region20
        $region19: #{tpu_custom_call.1} parent=11 // pred_region
          %236 = vsyncadd [#allocation8], 0
          %s237 = sshll.u32 %s2, 4
          %s238 = int_to_ptr.hbm [resolvable:$true] %s237
          %s239 = sshll.u32 [#allocation9], 4
          %s240 = int_to_ptr.vmem [resolvable:$true] %s239
          %245 = dma.hbm_to_vmem [thread:$0]  %s238, 128, %s240, [#allocation8], 64, 64, 4
        $region20: #{tpu_custom_call.1} parent=11 // pred_fallthru
          _
        // Predicated region
        $region21: #{tpu_custom_call.1} parent=11 // pred_check
          %p246 = pneg %p109
        $region22: #{tpu_custom_call.1} parent=11 // pred_check_branch
          %248 = sbr.rel (%p246) target = $region24
        $region23: #{tpu_custom_call.1} parent=11 // pred_region
          %250 = vsyncadd [#allocation11], 0
          %s251 = sshll.u32 %s3, 4
          %s252 = int_to_ptr.hbm [resolvable:$true] %s251
          %s253 = sshll.u32 [#allocation10], 4
          %s254 = int_to_ptr.vmem [resolvable:$true] %s253
          %259 = dma.hbm_to_vmem [thread:$0]  %s252, 128, %s254, [#allocation11], 64, 64, 4
        $region24: #{tpu_custom_call.1} parent=11 // pred_fallthru
          _
        // Predicated region
        $region25: #{tpu_custom_call.1} parent=11 // pred_check
          %p260 = pneg %p130
        $region26: #{tpu_custom_call.1} parent=11 // pred_check_branch
          %262 = sbr.rel (%p260) target = $region28
        $region27: #{tpu_custom_call.1} parent=11 // pred_region
          %264 = vsyncadd [#allocation11], 0
          %s265 = sshll.u32 %s4, 4
          %s266 = int_to_ptr.hbm [resolvable:$true] %s265
          %s267 = sshll.u32 [#allocation12], 4
          %s268 = int_to_ptr.vmem [resolvable:$true] %s267
          %273 = dma.hbm_to_vmem [thread:$0]  %s266, 128, %s268, [#allocation11], 64, 64, 4
        $region28: #{tpu_custom_call.1} parent=11 // pred_fallthru
          _
        // Predicated region
        $region29: #{tpu_custom_call.1} parent=11 // pred_check
          %p274 = pneg %p151
        $region30: #{tpu_custom_call.1} parent=11 // pred_check_branch
          %276 = sbr.rel (%p274) target = $region32
        $region31: #{tpu_custom_call.1} parent=11 // pred_region
          %278 = vsyncadd [#allocation14], 0
          %s279 = sshll.u32 %s5, 4
          %s280 = int_to_ptr.hbm [resolvable:$true] %s279
          %s281 = sshll.u32 [#allocation13], 4
          %s282 = int_to_ptr.vmem [resolvable:$true] %s281
          %287 = dma.hbm_to_vmem [thread:$0]  %s280, 128, %s282, [#allocation14], 64, 64, 4
        $region32: #{tpu_custom_call.1} parent=11 // pred_fallthru
          _
      $region12: #{tpu_custom_call.1} parent=5 // pred_fallthru
        _
      %p288 = scmp.lt.s32.totalorder %s20, 2
      // Predicated region
      $region33: #{tpu_custom_call.1} parent=5 // pred_check
        %p289 = pneg %p288
      $region34: #{tpu_custom_call.1} parent=5 // pred_check_branch
        %291 = sbr.rel (%p289) target = $region36
      $region35: #{tpu_custom_call.1} parent=5 // pred_region
        // Predicated region
        $region37: #{tpu_custom_call.1} parent=35 // pred_check
          %p292 = pneg %p40
        $region38: #{tpu_custom_call.1} parent=35 // pred_check_branch
          %294 = sbr.rel (%p292) target = $region40
        $region39: #{tpu_custom_call.1} parent=35 // pred_region
          %s295 = sand.u32 %s30, 1
          %s296 = scalar_lea.sflag [#allocation6], %s295
          %s297 = sand.u32 %s30, 1
          %s298 = smul.addr %s297, 32
          %s299 = scalar_lea.vmem [#allocation5], %s298
          %s300 = smul.u32 2, %s20
          %302 = vsyncadd %s296, 0
          %s303 = smul.addr %s300, 2
          %s304 = smul.addr %s303, 8
          %s305 = scalar_lea.hbm %s0, %s304
          %s306 = sshll.u32 %s305, 4
          %s307 = int_to_ptr.hbm [resolvable:$true] %s306
          %s308 = sshll.u32 %s299, 4
          %s309 = int_to_ptr.vmem [resolvable:$true] %s308
          %314 = dma.hbm_to_vmem [thread:$0]  %s307, 512, %s309, %s296, 128, 128, 8
        $region40: #{tpu_custom_call.1} parent=35 // pred_fallthru
          _
      $region36: #{tpu_custom_call.1} parent=5 // pred_fallthru
        _
      %p315 = scmp.le.s32.totalorder 1, %s20
      %p316 = scmp.lt.s32.totalorder %s20, 3
      %p317 = pnand %p315, %p316
      %p318 = pneg %p317
      // Predicated region
      $region41: #{tpu_custom_call.1} parent=5 // pred_check
        _
      $region42: #{tpu_custom_call.1} parent=5 // pred_check_branch
        %320 = sbr.rel (%p317) target = $region44
      $region43: #{tpu_custom_call.1} parent=5 // pred_region
        %s321 = ssub.s32 %s20, 1
        %s322 = sand.u32 %s33, 1
        %s323 = scalar_lea.sflag [#allocation6], %s322
        %s324 = sand.u32 %s33, 1
        %s325 = smul.addr %s324, 32
        %s326 = scalar_lea.vmem [#allocation5], %s325
        // Predicated region
        $region45: #{tpu_custom_call.1} parent=43 // pred_check
          %p327 = pneg %p46
        $region46: #{tpu_custom_call.1} parent=43 // pred_check_branch
          %329 = sbr.rel (%p327) target = $region48
        $region47: #{tpu_custom_call.1} parent=43 // pred_region
          %331 = dma.done %s323, 512
        $region48: #{tpu_custom_call.1} parent=43 // pred_fallthru
          _
        // Predicated region
        $region49: #{tpu_custom_call.1} parent=43 // pred_check
          %p332 = pneg %p67
        $region50: #{tpu_custom_call.1} parent=43 // pred_check_branch
          %334 = sbr.rel (%p332) target = $region52
        $region51: #{tpu_custom_call.1} parent=43 // pred_region
          %336 = dma.done [#allocation8], 128
        $region52: #{tpu_custom_call.1} parent=43 // pred_fallthru
          _
        // Predicated region
        $region53: #{tpu_custom_call.1} parent=43 // pred_check
          %p337 = pneg %p88
        $region54: #{tpu_custom_call.1} parent=43 // pred_check_branch
          %339 = sbr.rel (%p337) target = $region56
        $region55: #{tpu_custom_call.1} parent=43 // pred_region
          %341 = dma.done [#allocation8], 128
        $region56: #{tpu_custom_call.1} parent=43 // pred_fallthru
          _
        // Predicated region
        $region57: #{tpu_custom_call.1} parent=43 // pred_check
          %p342 = pneg %p109
        $region58: #{tpu_custom_call.1} parent=43 // pred_check_branch
          %344 = sbr.rel (%p342) target = $region60
        $region59: #{tpu_custom_call.1} parent=43 // pred_region
          %346 = dma.done [#allocation11], 128
        $region60: #{tpu_custom_call.1} parent=43 // pred_fallthru
          _
        // Predicated region
        $region61: #{tpu_custom_call.1} parent=43 // pred_check
          %p347 = pneg %p130
        $region62: #{tpu_custom_call.1} parent=43 // pred_check_branch
          %349 = sbr.rel (%p347) target = $region64
        $region63: #{tpu_custom_call.1} parent=43 // pred_region
          %351 = dma.done [#allocation11], 128
        $region64: #{tpu_custom_call.1} parent=43 // pred_fallthru
          _
        // Predicated region
        $region65: #{tpu_custom_call.1} parent=43 // pred_check
          %p352 = pneg %p151
        $region66: #{tpu_custom_call.1} parent=43 // pred_check_branch
          %354 = sbr.rel (%p352) target = $region68
        $region67: #{tpu_custom_call.1} parent=43 // pred_region
          %356 = dma.done [#allocation14], 128
        $region68: #{tpu_custom_call.1} parent=43 // pred_fallthru
          _
        %s357 = sand.u32 %s33, 1
        %s358 = scalar_lea.sflag [#allocation6], %s357
        %s359 = sand.u32 %s33, 1
        %s360 = smul.addr %s359, 32
        %s361 = scalar_lea.vmem [#allocation5], %s360
        %p362 = pneg %p46
        %p363 = pneg %p43
        %p364 = pneg %p67
        %p365 = pneg %p64
        %p366 = pneg %p88
        %p367 = pneg %p85
        %p368 = pneg %p109
        %p369 = pneg %p106
        %p370 = pneg %p130
        %p371 = pneg %p127
        %p372 = pneg %p151
        %p373 = pneg %p148
        %p374 = pneg %p177
        %p375 = pneg %p174
        %s376 = smul.u32 4, %s25
        %p377 = scmp.lt.s32.totalorder %s376, 7
        %s378 = scalar_select %p377, %s376, 7
        %s379 = smul.addr %s378, 8
        %s380 = scalar_lea.vmem %s6, %s379
        %p381 = pneg %p203
        %p382 = pneg %p200
        %s383 = smul.u32 4, %s25
        %p384 = scmp.lt.s32.totalorder %s383, 7
        %s385 = scalar_select %p384, %s383, 7
        %s386 = smul.addr %s385, 8
        %s387 = scalar_lea.vmem %s7, %s386
        %s388 = smul.u32 2, %s25
        %s389 = smul.u32 4, %s25
        %p390 = scmp.lt.s32.totalorder %s389, 7
        %s391 = scalar_select %p390, %s389, 7
        %s392 = smul.addr %s391, 8
        %s393 = scalar_lea.vmem %s6, %s392
        %s394 = smul.u32 4, %s25
        %s395 = smul.u32 4, %s25
        %p396 = scmp.lt.s32.totalorder %s395, 7
        %s397 = scalar_select %p396, %s395, 7
        %s398 = smul.addr %s397, 8
        %s399 = scalar_lea.vmem %s7, %s398
        %s400 = smul.u32 4, %s25
        %v402 = vld [vmem:[%s326] sm:$0xff]
        %v403 = vld [vmem:[%s326 + $0x8] sm:$0xff]
        %v404 = vmax.f32 %v402, 0.0
        %v405 = vmax.f32 %v403, 0.0
        %v406 = vand.u32 2147483647, %v402
        %v407 = vand.u32 2147483647, %v403
        %v408 = vsub.f32 0.0, %v406
        %v409 = vsub.f32 0.0, %v407
        %v410 = vmul.f32 %v408, 1.442695
        %v411 = vpow.pop %v410
        %v412 = vmul.f32 %v409, 1.442695
        %v413 = vpow.pop %v412
        %v414 = vadd.f32 %v411, 1.0
        %v415 = vadd.f32 %v413, 1.0
        %v416 = vlog2.pop %v414
        %v417 = vmul.f32 %v416, 0.6931472
        %v418 = vlog2.pop %v415
        %v419 = vmul.f32 %v418, 0.6931472
        %v420 = vadd.f32 %v404, %v417
        %v421 = vadd.f32 %v405, %v419
        %v422 = vpack.c.bf16 %v420, %v420
        %v423 = vpack.c.bf16 %v421, %v421
        %vm424 = vcmask 125952
        %425 = vst.msk [vmem:[#allocation2] sm:$0xf] %vm424, %v422
        %426 = vst.msk [vmem:[#allocation2 + $0x4] sm:$0xf] %vm424, %v423
        %s427 = scalar_lea.vmem %s326, 16 [#allocation5]
        %v428 = vld [vmem:[%s427] sm:$0xff]
        %v429 = vld [vmem:[%s427 + $0x8] sm:$0xff]
        %v430 = vmax.f32 %v428, 0.0
        %v431 = vmax.f32 %v429, 0.0
        %v432 = vand.u32 2147483647, %v428
        %v433 = vand.u32 2147483647, %v429
        %v434 = vsub.f32 0.0, %v432
        %v435 = vsub.f32 0.0, %v433
        %v436 = vmul.f32 %v434, 1.442695
        %v437 = vpow.pop %v436
        %v438 = vmul.f32 %v435, 1.442695
        %v439 = vpow.pop %v438
        %v440 = vadd.f32 %v437, 1.0
        %v441 = vadd.f32 %v439, 1.0
        %v442 = vlog2.pop %v440
        %v443 = vmul.f32 %v442, 0.6931472
        %v444 = vlog2.pop %v441
        %v445 = vmul.f32 %v444, 0.6931472
        %v446 = vadd.f32 %v430, %v443
        %v447 = vadd.f32 %v431, %v445
        %v448 = vpack.c.bf16 %v446, %v446
        %v449 = vpack.c.bf16 %v447, %v447
        %452 = vrot.lane.b32.xlu0 %v448, 16
        %v453 = vpop.permute.xlu0 %452
        %454 = vrot.lane.b32.xlu0 %v449, 16
        %v455 = vpop.permute.xlu0 %454
        %vm458 = vcmask 257152
        %459 = vst.msk [vmem:[#allocation2] sm:$0xf] %vm458, %v453
        %460 = vst.msk [vmem:[#allocation2 + $0x4] sm:$0xf] %vm458, %v455
        %v461 = vld [vmem:[#allocation2] sm:$0xf]
        %v462 = vld [vmem:[#allocation2 + $0x4] sm:$0xf]
        %v463 = vld [vmem:[#allocation7] sm:$0xf]
        %v464 = vld [vmem:[#allocation7 + $0x4] sm:$0xf]
        %v467 = vunpack.c.l.b16 %v463
        %v468 = vunpack.c.l.b16 %v464
        %v469 = vpack.c.b16 %v468, %v467
        %v472 = vunpack.c.l.b16 %v461
        %v473 = vunpack.c.l.b16 %v462
        %v474 = vpack.c.b16 %v473, %v472
        %vm476 = vcmask 130048
        %v478 = vsel %vm476, %v469, 0
        %480 = vmatpush.bf16.msra.mxu0 0
        %481 = vmatpush.bf16.msra.mxu0 0
        %482 = vmatpush.bf16.msra.mxu0 0
        %483 = vmatpush.bf16.msra.mxu0 0
        %484 = vmatpush.bf16.msra.mxu0 0
        %485 = vmatpush.bf16.msra.mxu0 0
        %486 = vmatpush.bf16.msra.mxu0 0
        %487 = vmatpush.bf16.msra.mxu0 %v474
        %488 = vmatmul.bf16.gmra.mxu0 %v478
        %v489 = vpop.f32.mrf.mxu0
        %v490 = vadd.f32 0.0, %v489
        %v491 = vpop.f32.mrf.mxu0
        %v492 = vadd.f32 0.0, %v491
        %493 = vdwg.mxu0
        %v494 = vld [vmem:[#allocation9] sm:$0xf]
        %v495 = vld [vmem:[#allocation9 + $0x4] sm:$0xf]
        %v498 = vunpack.c.l.b16 %v494
        %v499 = vunpack.c.l.b16 %v495
        %v500 = vpack.c.b16 %v499, %v498
        %v502 = vsel %vm476, %v500, 0
        %504 = vmatpush.bf16.msra.mxu0 0
        %505 = vmatpush.bf16.msra.mxu0 0
        %506 = vmatpush.bf16.msra.mxu0 0
        %507 = vmatpush.bf16.msra.mxu0 0
        %508 = vmatpush.bf16.msra.mxu0 0
        %509 = vmatpush.bf16.msra.mxu0 0
        %510 = vmatpush.bf16.msra.mxu0 0
        %511 = vmatpush.bf16.msra.mxu0 %v474
        %512 = vmatmul.bf16.gmra.mxu0 %v502
        %v513 = vpop.f32.mrf.mxu0
        %v514 = vadd.f32 0.0, %v513
        %v515 = vpop.f32.mrf.mxu0
        %v516 = vadd.f32 0.0, %v515
        %517 = vdwg.mxu0
        %v518 = vpack.c.bf16 %v490, %v490
        %v519 = vpack.c.bf16 %v492, %v492
        %520 = vst.msk [vmem:[#allocation3] sm:$0xf] %vm424, %v518
        %521 = vst.msk [vmem:[#allocation3 + $0x4] sm:$0xf] %vm424, %v519
        %v522 = vpack.c.bf16 %v514, %v514
        %v523 = vpack.c.bf16 %v516, %v516
        %524 = vst.msk [vmem:[#allocation4] sm:$0xf] %vm424, %v522
        %525 = vst.msk [vmem:[#allocation4 + $0x4] sm:$0xf] %vm424, %v523
        %528 = vrot.lane.b32.xlu0 %v518, 112
        %v529 = vpop.permute.xlu0 %528
        %530 = vrot.lane.b32.xlu0 %v519, 112
        %v531 = vpop.permute.xlu0 %530
        %534 = vst.msk [vmem:[#allocation3 + $0x8] sm:$0xf] %vm424, %v529
        %535 = vst.msk [vmem:[#allocation3 + $0xc] sm:$0xf] %vm424, %v531
        %538 = vrot.lane.b32.xlu0 %v522, 112
        %v539 = vpop.permute.xlu0 %538
        %540 = vrot.lane.b32.xlu0 %v523, 112
        %v541 = vpop.permute.xlu0 %540
        %544 = vst.msk [vmem:[#allocation4 + $0x8] sm:$0xf] %vm424, %v539
        %545 = vst.msk [vmem:[#allocation4 + $0xc] sm:$0xf] %vm424, %v541
        %v546 = vld [vmem:[#allocation3] sm:$0xf]
        %v547 = vld [vmem:[#allocation3 + $0x4] sm:$0xf]
        %v548 = vld [vmem:[#allocation3 + $0x8] sm:$0xf]
        %v549 = vld [vmem:[#allocation3 + $0xc] sm:$0xf]
        %v550 = vld [vmem:[#allocation4] sm:$0xf]
        %v551 = vld [vmem:[#allocation4 + $0x4] sm:$0xf]
        %v552 = vld [vmem:[#allocation4 + $0x8] sm:$0xf]
        %v553 = vld [vmem:[#allocation4 + $0xc] sm:$0xf]
        %v554 = vld [vmem:[#allocation10] sm:$0xf]
        %v555 = vld [vmem:[#allocation10 + $0x4] sm:$0xf]
        %v560 = vunpack.c.l.b16 %v546
        %v561 = vunpack.c.l.b16 %v547
        %v562 = vunpack.c.l.b16 %v548
        %v563 = vunpack.c.l.b16 %v549
        %v564 = vpack.c.b16 %v561, %v560
        %v565 = vpack.c.b16 %v563, %v562
        %v568 = vunpack.c.l.b16 %v554
        %v569 = vunpack.c.l.b16 %v555
        %v570 = vpack.c.b16 %v569, %v568
        %v573 = vsel %vm476, %v564, 0
        %v576 = vsel %vm476, %v565, 0
        %578 = vmatpush.bf16.msra.mxu0 0
        %579 = vmatpush.bf16.msra.mxu0 0
        %580 = vmatpush.bf16.msra.mxu0 0
        %581 = vmatpush.bf16.msra.mxu0 0
        %582 = vmatpush.bf16.msra.mxu0 0
        %583 = vmatpush.bf16.msra.mxu0 0
        %584 = vmatpush.bf16.msra.mxu0 0
        %585 = vmatpush.bf16.msra.mxu0 %v570
        %586 = vmatmul.bf16.gmra.mxu0 %v573
        %v587 = vpop.f32.mrf.mxu0
        %v588 = vadd.f32 0.0, %v587
        %v589 = vpop.f32.mrf.mxu0
        %v590 = vadd.f32 0.0, %v589
        %591 = vmatmul.bf16.gmra.mxu0 %v576
        %v592 = vpop.f32.mrf.mxu0
        %v593 = vadd.f32 0.0, %v592
        %v594 = vpop.f32.mrf.mxu0
        %v595 = vadd.f32 0.0, %v594
        %596 = vdwg.mxu0
        %v597 = vld [vmem:[#allocation12] sm:$0xf]
        %v598 = vld [vmem:[#allocation12 + $0x4] sm:$0xf]
        %v603 = vunpack.c.l.b16 %v550
        %v604 = vunpack.c.l.b16 %v551
        %v605 = vunpack.c.l.b16 %v552
        %v606 = vunpack.c.l.b16 %v553
        %v607 = vpack.c.b16 %v604, %v603
        %v608 = vpack.c.b16 %v606, %v605
        %v611 = vunpack.c.l.b16 %v597
        %v612 = vunpack.c.l.b16 %v598
        %v613 = vpack.c.b16 %v612, %v611
        %v616 = vsel %vm476, %v607, 0
        %v619 = vsel %vm476, %v608, 0
        %621 = vmatpush.bf16.msra.mxu0 0
        %622 = vmatpush.bf16.msra.mxu0 0
        %623 = vmatpush.bf16.msra.mxu0 0
        %624 = vmatpush.bf16.msra.mxu0 0
        %625 = vmatpush.bf16.msra.mxu0 0
        %626 = vmatpush.bf16.msra.mxu0 0
        %627 = vmatpush.bf16.msra.mxu0 0
        %628 = vmatpush.bf16.msra.mxu0 %v613
        %629 = vmatmul.bf16.gmra.mxu0 %v616
        %v630 = vpop.f32.mrf.mxu0
        %v631 = vadd.f32 0.0, %v630
        %v632 = vpop.f32.mrf.mxu0
        %v633 = vadd.f32 0.0, %v632
        %634 = vmatmul.bf16.gmra.mxu0 %v619
        %v635 = vpop.f32.mrf.mxu0
        %v636 = vadd.f32 0.0, %v635
        %v637 = vpop.f32.mrf.mxu0
        %v638 = vadd.f32 0.0, %v637
        %639 = vdwg.mxu0
        %v640 = vsub.f32 %v588, %v631
        %v641 = vsub.f32 %v590, %v633
        %v642 = vsub.f32 %v593, %v636
        %v643 = vsub.f32 %v595, %v638
        %644 = vst.msk [vmem:[%s393] sm:$0xff] %vm476, %v640
        %645 = vst.msk [vmem:[%s393 + $0x8] sm:$0xff] %vm476, %v641
        %646 = vst.msk [vmem:[%s393 + $0x10] sm:$0xff] %vm476, %v642
        %647 = vst.msk [vmem:[%s393 + $0x18] sm:$0xff] %vm476, %v643
        %v648 = vadd.f32 %v588, %v631
        %v649 = vadd.f32 %v590, %v633
        %v650 = vadd.f32 %v593, %v636
        %v651 = vadd.f32 %v595, %v638
        %v652 = vunpack.c.l.bf16 %v546
        %v653 = vunpack.c.l.bf16 %v547
        %v654 = vunpack.c.l.bf16 %v548
        %v655 = vunpack.c.l.bf16 %v549
        %v656 = vunpack.c.l.bf16 %v550
        %v657 = vunpack.c.l.bf16 %v551
        %v658 = vunpack.c.l.bf16 %v552
        %v659 = vunpack.c.l.bf16 %v553
        %v660 = vadd.f32 %v652, %v656
        %v661 = vadd.f32 %v653, %v657
        %v662 = vadd.f32 %v654, %v658
        %v663 = vadd.f32 %v655, %v659
        %v664 = vpack.c.bf16 %v661, %v660
        %v665 = vpack.c.bf16 %v663, %v662
        %v666 = vld [vmem:[#allocation13] sm:$0xf]
        %v667 = vld [vmem:[#allocation13 + $0x4] sm:$0xf]
        %v670 = vunpack.c.l.b16 %v666
        %v671 = vunpack.c.l.b16 %v667
        %v672 = vpack.c.b16 %v671, %v670
        %v675 = vsel %vm476, %v664, 0
        %v678 = vsel %vm476, %v665, 0
        %680 = vmatpush.bf16.msra.mxu0 0
        %681 = vmatpush.bf16.msra.mxu0 0
        %682 = vmatpush.bf16.msra.mxu0 0
        %683 = vmatpush.bf16.msra.mxu0 0
        %684 = vmatpush.bf16.msra.mxu0 0
        %685 = vmatpush.bf16.msra.mxu0 0
        %686 = vmatpush.bf16.msra.mxu0 0
        %687 = vmatpush.bf16.msra.mxu0 %v672
        %688 = vmatmul.bf16.gmra.mxu0 %v675
        %v689 = vpop.f32.mrf.mxu0
        %v690 = vadd.f32 0.0, %v689
        %v691 = vpop.f32.mrf.mxu0
        %v692 = vadd.f32 0.0, %v691
        %693 = vmatmul.bf16.gmra.mxu0 %v678
        %v694 = vpop.f32.mrf.mxu0
        %v695 = vadd.f32 0.0, %v694
        %v696 = vpop.f32.mrf.mxu0
        %v697 = vadd.f32 0.0, %v696
        %698 = vdwg.mxu0
        %v699 = vsub.f32 %v690, %v648
        %v700 = vsub.f32 %v692, %v649
        %v701 = vsub.f32 %v695, %v650
        %v702 = vsub.f32 %v697, %v651
        %703 = vst.msk [vmem:[%s399] sm:$0xff] %vm476, %v699
        %704 = vst.msk [vmem:[%s399 + $0x8] sm:$0xff] %vm476, %v700
        %705 = vst.msk [vmem:[%s399 + $0x10] sm:$0xff] %vm476, %v701
        %706 = vst.msk [vmem:[%s399 + $0x18] sm:$0xff] %vm476, %v702
        %s707 = smul.u32 4, %s25
        %p708 = scmp.lt.s32.totalorder %s707, 7
        %s709 = scalar_select %p708, %s707, 7
        %s710 = smul.addr %s709, 8
        %s711 = scalar_lea.vmem %s6, %s710
        %s712 = smul.u32 4, %s25
        %p713 = scmp.lt.s32.totalorder %s712, 7
        %s714 = scalar_select %p713, %s712, 7
        %s715 = smul.addr %s714, 8
        %s716 = scalar_lea.vmem %s7, %s715
        // Predicated region
        $region69: #{tpu_custom_call.1} parent=43 // pred_check
          %p717 = pneg %p174
        $region70: #{tpu_custom_call.1} parent=43 // pred_check_branch
          %719 = sbr.rel (%p717) target = $region72
        $region71: #{tpu_custom_call.1} parent=43 // pred_region
          %s720 = smul.u32 4, %s25
        $region72: #{tpu_custom_call.1} parent=43 // pred_fallthru
          _
        // Predicated region
        $region73: #{tpu_custom_call.1} parent=43 // pred_check
          %p721 = pneg %p200
        $region74: #{tpu_custom_call.1} parent=43 // pred_check_branch
          %723 = sbr.rel (%p721) target = $region76
        $region75: #{tpu_custom_call.1} parent=43 // pred_region
          %s724 = smul.u32 4, %s25
        $region76: #{tpu_custom_call.1} parent=43 // pred_fallthru
          _
      $region44: #{tpu_custom_call.1} parent=5 // pred_fallthru
        _
      %p725 = scmp.le.s32.totalorder 2, %s20
      // Predicated region
      $region77: #{tpu_custom_call.1} parent=5 // pred_check
        %p726 = pneg %p725
      $region78: #{tpu_custom_call.1} parent=5 // pred_check_branch
        %728 = sbr.rel (%p726) target = $region80
      $region79: #{tpu_custom_call.1} parent=5 // pred_region
        %s729 = ssub.s32 %s20, 2
        // Predicated region
        $region81: #{tpu_custom_call.1} parent=79 // pred_check
          %p730 = pneg %p180
        $region82: #{tpu_custom_call.1} parent=79 // pred_check_branch
          %732 = sbr.rel (%p730) target = $region84
        $region83: #{tpu_custom_call.1} parent=79 // pred_region
          %s733 = smul.u32 4, %s26
          %p734 = scmp.lt.s32.totalorder %s733, 7
          %s735 = scalar_select %p734, %s733, 7
          %s736 = smul.addr %s735, 8
          %s737 = scalar_lea.vmem %s6, %s736
        $region84: #{tpu_custom_call.1} parent=79 // pred_fallthru
          _
        // Predicated region
        $region85: #{tpu_custom_call.1} parent=79 // pred_check
          %p738 = pneg %p206
        $region86: #{tpu_custom_call.1} parent=79 // pred_check_branch
          %740 = sbr.rel (%p738) target = $region88
        $region87: #{tpu_custom_call.1} parent=79 // pred_region
          %s741 = smul.u32 4, %s26
          %p742 = scmp.lt.s32.totalorder %s741, 7
          %s743 = scalar_select %p742, %s741, 7
          %s744 = smul.addr %s743, 8
          %s745 = scalar_lea.vmem %s7, %s744
        $region88: #{tpu_custom_call.1} parent=79 // pred_fallthru
          _
      $region80: #{tpu_custom_call.1} parent=5 // pred_fallthru
        _
    $region6: #{tpu_custom_call.1} parent=1 // loop_footer
      %s24 = sadd.s32 1, %s20
    $region7: #{tpu_custom_call.1} parent=1 // loop_footer_branch
      %19 = sbr.rel target = $region3
    $region8: #{tpu_custom_call.1} parent=1 // loop_exit
      _
    %746 = vsyncpa [#allocation6], 1
    %s747 = scalar_lea.sflag [#allocation6], 1
    %748 = vsyncpa %s747, 1
    %749 = vsyncpa [#allocation8], 1
    %750 = vsyncpa [#allocation11], 1
    %751 = vsyncpa [#allocation14], 1

</llo_original>
